<compile_context>
chip_gen: v5e
topology: v5e:2x2
jax: 0.10.0
libtpu: 0.0.40
codegen_flags: <defaults>
</compile_context>

<pallas_src>
import functools
import numpy as np

import jax
import jax.numpy as jnp
from jax import lax
from jax.experimental import pallas as pl
from jax.experimental.pallas import tpu as pltpu


# ----------------------------------------------------------------------------
# Fused kernel:
#   fc (Linear+ReLU) -> linear_output_to_tag -> log_softmax
#   -> Viterbi forward recursion (backpointers in VMEM scratch)
#   -> terminal argmax + on-device backtracking
# ----------------------------------------------------------------------------
def _crf_fused_kernel(x_ref, w1_ref, b1_ref, w2_ref, b2_ref, trans_ref,
                      ts_ref, path_ref, score_ref, start_ref,
                      bp_ref, *, sos_idx, eos_idx):
    n, t = ts_ref.shape

    # ---------------- MLP + log_softmax ----------------
    # TODO(synk): nn.Dropout omitted (inference/eval semantics -> identity).
    # TODO(synk): at production BERT widths (E=768+) cast x/w to bf16 for the MXU
    #             and tile the token dim with a BlockSpec grid; at these toy
    #             shapes a single f32 VMEM-resident block is the right choice.
    x = x_ref[...]                                                        # (N, E)
    h = jnp.dot(x, w1_ref[...], preferred_element_type=jnp.float32) + b1_ref[...]
    h = jnp.maximum(h, 0.0)                                               # ReLU
    logits = jnp.dot(h, w2_ref[...], preferred_element_type=jnp.float32) + b2_ref[...]
    m = jnp.max(logits, axis=1, keepdims=True)
    lse = m + jnp.log(jnp.sum(jnp.exp(logits - m), axis=1, keepdims=True))
    ts_ref[...] = logits - lse        # tag_scores; stays VMEM-resident for Viterbi

    # ---------------- Viterbi forward recursion (serial over all tokens) --------
    # Loop-invariant values hoisted once.
    trans = trans_ref[...]                                                # (T,T) [next, prev]
    prev_iota = lax.broadcasted_iota(jnp.int32, (t, t), 1)                # prev ids (lanes)
    lane_iota = lax.broadcasted_iota(jnp.int32, (1, t), 1)                # (1, T)
    init_fwd = jnp.where(lane_iota == sos_idx, 0.0, -10000.0).astype(jnp.float32)

    def fwd_body(i, fwd_row):                                             # fwd_row: (1,T) over prev
        feat = ts_ref[pl.ds(i, 1), :]                                     # (1, T)
        nt = fwd_row + trans                                              # (T, T) [next, prev]
        vmax = jnp.max(nt, axis=1, keepdims=True)                         # (T, 1)
        # first-occurrence argmax over prev (matches torch.max tie behaviour)
        bp_col = jnp.min(jnp.where(nt >= vmax, prev_iota, t),
                         axis=1, keepdims=True)                           # (T, 1) int32
        bp_ref[pl.ds(i, 1), :] = jnp.transpose(bp_col)                    # VMEM scratch only
        return jnp.transpose(vmax) + feat                                 # next forward_var

    fwd = lax.fori_loop(0, n, fwd_body, init_fwd)

    # ---------------- terminal step + on-device backtracking ----------------
    terminal = fwd + trans[eos_idx:eos_idx + 1, :]                        # (1, T)
    t_max = jnp.max(terminal, axis=1, keepdims=True)                      # (1, 1)
    best = jnp.min(jnp.where(terminal >= t_max, lane_iota, t),
                   axis=1, keepdims=True).astype(jnp.int32)               # (1, 1)
    score_ref[...] = t_max
    path_ref[pl.ds(n - 1, 1), :] = best

    def bwd_body(j, cur):                                                 # cur: (1,1) int32
        i = n - 2 - j
        bp_row = bp_ref[pl.ds(i + 1, 1), :]                               # (1, T)
        nxt = jnp.sum(jnp.where(lane_iota == cur, bp_row, 0),
                      axis=1, keepdims=True).astype(jnp.int32)            # bp[i+1, cur]
        path_ref[pl.ds(i, 1), :] = nxt
        return nxt

    first = lax.fori_loop(0, n - 1, bwd_body, best)
    # tag that the reference implementation pops off the path (must equal SOS)
    start_ref[...] = jnp.sum(
        jnp.where(lane_iota == first, bp_ref[pl.ds(0, 1), :], 0),
        axis=1, keepdims=True).astype(jnp.int32)


def crf_mlp_viterbi(x, w1, b1, w2, b2, transitions, sos_idx, eos_idx):
    n, e = x.shape
    hdim = w1.shape[1]
    t = w2.shape[1]
    kern = functools.partial(_crf_fused_kernel, sos_idx=sos_idx, eos_idx=eos_idx)
    flops = 2 * n * e * hdim + 2 * n * hdim * t + 8 * n * t * t
    bytes_accessed = 4 * (n * e + e * hdim + hdim + hdim * t + t + t * t
                          + n * t + n + 2)
    return pl.pallas_call(
        kern,
        out_shape=(
            jax.ShapeDtypeStruct((n, t), jnp.float32),   # tag_scores (log_softmax)
            jax.ShapeDtypeStruct((n, 1), jnp.int32),     # decoded best path
            jax.ShapeDtypeStruct((1, 1), jnp.float32),   # crf path score
            jax.ShapeDtypeStruct((1, 1), jnp.int32),     # start tag (should be SOS)
        ),
        scratch_shapes=[pltpu.VMEM((n, t), jnp.int32)],  # backpointers never leave VMEM
        cost_estimate=pl.CostEstimate(flops=flops,
                                      transcendentals=n * (t + 1),
                                      bytes_accessed=bytes_accessed),
    )(x, w1, b1, w2, b2, transitions)


# ----------------------------------------------------------------------------
# Wrapper reproducing CRF_NN_BERT.forward (tag_scores, crf_score, seqs_tag)
# ----------------------------------------------------------------------------
def crf_nn_bert_forward(embedded_with_special, params, sos_idx, eos_idx):
    # TODO(synk): BERT tokenizer + encoder have no Pallas equivalent; the caller
    #             supplies a synthetic last_hidden_state including [CLS]/[SEP].
    # del_special_token: synthetic sequences are full length -> strip [CLS]/[SEP].
    embedded = embedded_with_special[:, 1:-1, :]                          # (B, S, E)
    b, s, e = embedded.shape
    x = embedded.reshape(b * s, e)                                        # flatten tokens

    tag_scores, path, score, start_tag = crf_mlp_viterbi(
        x, params["w1"], params["b1"], params["w2"], params["b2"],
        params["transitions"], sos_idx, eos_idx)
    return tag_scores, score[0, 0], path[:, 0], start_tag[0, 0]


# ----------------------------------------------------------------------------
# Pure-numpy reference of the same forward pass (correctness check only)
# ----------------------------------------------------------------------------
def _numpy_reference(x, params, sos_idx, eos_idx):
    xn = np.asarray(x, np.float32)
    w1 = np.asarray(params["w1"], np.float32)
    b1 = np.asarray(params["b1"], np.float32)
    w2 = np.asarray(params["w2"], np.float32)
    b2 = np.asarray(params["b2"], np.float32)
    trans = np.asarray(params["transitions"], np.float32)

    h = np.maximum(xn @ w1 + b1, 0.0)
    logits = h @ w2 + b2
    m = logits.max(axis=1, keepdims=True)
    ts = logits - (m + np.log(np.exp(logits - m).sum(axis=1, keepdims=True)))

    t = trans.shape[0]
    fwd = np.full((t,), -10000.0, np.float32)
    fwd[sos_idx] = 0.0
    bps = []
    for i in range(ts.shape[0]):
        nt = fwd[None, :] + trans                  # [next, prev]
        bps.append(nt.argmax(axis=1))
        fwd = nt.max(axis=1) + ts[i]
    terminal = fwd + trans[eos_idx]
    best = int(terminal.argmax())
    score = float(terminal[best])
    path = [best]
    for bp in reversed(bps):
        best = int(bp[best])
        path.append(best)
    start = path.pop()
    path.reverse()
    return ts, score, path, start


if __name__ == "__main__":
    # Small shapes consistent with the module
    B = 2          # batch_size
    S = 8          # tokens per sentence after removing [CLS]/[SEP]
    E = 32         # embedding_dim (BERT hidden size, synthetic)
    H = 32         # hidden_dim
    T = 8          # tags_size (6 real tags + SOS + EOS)
    SOS_IDX, EOS_IDX = 6, 7

    key = jax.random.PRNGKey(0)
    k_emb, k_w1, k_b1, k_w2, k_b2, k_tr = jax.random.split(key, 6)

    # TODO(synk): BERT tokenizer + encoder not translatable to a Pallas kernel;
    # synthetic deterministic "last_hidden_state" with [CLS]/[SEP] positions instead.
    embedded_with_special = jax.random.normal(k_emb, (B, S + 2, E), jnp.float32)

    transitions = jax.random.normal(k_tr, (T, T), jnp.float32)
    transitions = transitions.at[SOS_IDX, :].set(-10000.0)   # never transition into SOS
    transitions = transitions.at[:, EOS_IDX].set(-10000.0)   # never transition out of EOS

    params = {
        "w1": jax.random.normal(k_w1, (E, H), jnp.float32) * 0.1,
        "b1": jax.random.normal(k_b1, (1, H), jnp.float32) * 0.1,
        "w2": jax.random.normal(k_w2, (H, T), jnp.float32) * 0.1,
        "b2": jax.random.normal(k_b2, (1, T), jnp.float32) * 0.1,
        "transitions": transitions,
    }

    # jit the whole forward (slice + reshape + fused kernel) into one program so
    # the host dispatches a single executable per call.
    forward_fn = jax.jit(functools.partial(
        crf_nn_bert_forward, sos_idx=SOS_IDX, eos_idx=EOS_IDX))

    tag_scores, crf_score, path_dev, start_tag = forward_fn(
        embedded_with_special, params)
    jax.block_until_ready((tag_scores, crf_score, path_dev, start_tag))

    # single host transfer at the very end (backtracking runs on-device)
    seqs_tag = [int(v) for v in np.asarray(path_dev)]
    crf_score_f = float(crf_score)

    assert tag_scores.shape == (B * S, T)
    assert len(seqs_tag) == B * S
    assert int(start_tag) == SOS_IDX
    # rows of log_softmax must (log-)sum to ~1
    assert np.allclose(np.exp(np.asarray(tag_scores)).sum(axis=1), 1.0, atol=1e-4)

    # check against a pure-numpy reference of the same forward pass
    embedded_np = np.asarray(embedded_with_special)[:, 1:-1, :].reshape(B * S, E)
    ts_np, score_np, path_np, start_np = _numpy_reference(
        embedded_np, params, SOS_IDX, EOS_IDX)
    assert np.allclose(np.asarray(tag_scores), ts_np, atol=1e-3, rtol=1e-3)
    assert seqs_tag == path_np
    assert abs(crf_score_f - score_np) < 1e-2
    assert start_np == SOS_IDX

    print("KERNEL_OK")
</pallas_src>

<mosaic_0001>
module attributes {stable_mosaic.version = 11 : i64} {
  func.func @_crf_fused_kernel(%arg0: memref<16x32xf32, #tpu.memory_space<vmem>>, %arg1: memref<32x32xf32, #tpu.memory_space<vmem>>, %arg2: memref<1x32xf32, #tpu.memory_space<vmem>>, %arg3: memref<32x8xf32, #tpu.memory_space<vmem>>, %arg4: memref<1x8xf32, #tpu.memory_space<vmem>>, %arg5: memref<8x8xf32, #tpu.memory_space<vmem>>, %arg6: memref<16x8xf32, #tpu.memory_space<vmem>>, %arg7: memref<16x1xi32, #tpu.memory_space<vmem>>, %arg8: memref<1x1xf32, #tpu.memory_space<vmem>>, %arg9: memref<1x1xi32, #tpu.memory_space<vmem>>, %arg10: memref<16x8xi32, #tpu.memory_space<vmem>>) attributes {dimension_semantics = [], scalar_prefetch = 0 : i64, scratch_operands = 1 : i64, tpu.core_type = #tpu.core_type<tc>} {
    %c0 = arith.constant 0 : index
    %c0_0 = arith.constant 0 : index
    %0 = vector.load %arg0[%c0, %c0_0] : memref<16x32xf32, #tpu.memory_space<vmem>>, vector<16x32xf32>
    %c0_1 = arith.constant 0 : index
    %c0_2 = arith.constant 0 : index
    %1 = vector.load %arg1[%c0_1, %c0_2] : memref<32x32xf32, #tpu.memory_space<vmem>>, vector<32x32xf32>
    %cst = arith.constant dense<0.000000e+00> : vector<16x32xf32>
    %2 = tpu.matmul %0, %1, %cst {dimension_numbers = #tpu.dot_dimension_numbers<[1], [0], [0], [1], [0, 0, 1, 1], [], []>} : vector<16x32xf32>, vector<32x32xf32>, vector<16x32xf32> -> vector<16x32xf32>
    %c0_3 = arith.constant 0 : index
    %c0_4 = arith.constant 0 : index
    %3 = vector.load %arg2[%c0_3, %c0_4] : memref<1x32xf32, #tpu.memory_space<vmem>>, vector<1x32xf32>
    %4 = vector.broadcast %3 : vector<1x32xf32> to vector<16x32xf32>
    %5 = arith.addf %2, %4 : vector<16x32xf32>
    %cst_5 = arith.constant 0.000000e+00 : f32
    %6 = vector.broadcast %cst_5 : f32 to vector<16x32xf32>
    %7 = arith.maximumf %5, %6 : vector<16x32xf32>
    %c0_6 = arith.constant 0 : index
    %c0_7 = arith.constant 0 : index
    %8 = vector.load %arg3[%c0_6, %c0_7] : memref<32x8xf32, #tpu.memory_space<vmem>>, vector<32x8xf32>
    %cst_8 = arith.constant dense<0.000000e+00> : vector<16x8xf32>
    %9 = tpu.matmul %7, %8, %cst_8 {dimension_numbers = #tpu.dot_dimension_numbers<[1], [0], [0], [1], [0, 0, 1, 1], [], []>} : vector<16x32xf32>, vector<32x8xf32>, vector<16x8xf32> -> vector<16x8xf32>
    %c0_9 = arith.constant 0 : index
    %c0_10 = arith.constant 0 : index
    %10 = vector.load %arg4[%c0_9, %c0_10] : memref<1x8xf32, #tpu.memory_space<vmem>>, vector<1x8xf32>
    %11 = vector.broadcast %10 : vector<1x8xf32> to vector<16x8xf32>
    %12 = arith.addf %9, %11 : vector<16x8xf32>
    %cst_11 = arith.constant dense<0xFF800000> : vector<16xf32>
    %13 = vector.multi_reduction <maximumf>, %12, %cst_11 [1] : vector<16x8xf32> to vector<16xf32>
    %14 = vector.shape_cast %13 : vector<16xf32> to vector<16x1xf32>
    %15 = vector.broadcast %14 : vector<16x1xf32> to vector<16x8xf32>
    %16 = arith.subf %12, %15 : vector<16x8xf32>
    %17 = math.exp %16 : vector<16x8xf32>
    %cst_12 = arith.constant dense<0.000000e+00> : vector<16xf32>
    %18 = vector.multi_reduction <add>, %17, %cst_12 [1] : vector<16x8xf32> to vector<16xf32>
    %19 = vector.shape_cast %18 : vector<16xf32> to vector<16x1xf32>
    %20 = math.log %19 : vector<16x1xf32>
    %21 = arith.addf %14, %20 : vector<16x1xf32>
    %22 = vector.broadcast %21 : vector<16x1xf32> to vector<16x8xf32>
    %23 = arith.subf %12, %22 : vector<16x8xf32>
    %c0_13 = arith.constant 0 : index
    %c0_14 = arith.constant 0 : index
    %24 = vector.load %arg6[%c0_13, %c0_14] : memref<16x8xf32, #tpu.memory_space<vmem>>, vector<16x8xf32>
    tpu.vector_store %arg6[%c0_13, %c0_14], %23 {strides = array<i32>} : memref<16x8xf32, #tpu.memory_space<vmem>>, vector<16x8xf32>,
    %c0_15 = arith.constant 0 : index
    %c0_16 = arith.constant 0 : index
    %25 = vector.load %arg5[%c0_15, %c0_16] : memref<8x8xf32, #tpu.memory_space<vmem>>, vector<8x8xf32>
    %26 = tpu.iota {dimensions = array<i32: 1>} : vector<8x8xi32>
    %27 = tpu.iota {dimensions = array<i32: 1>} : vector<1x8xi32>
    %c6_i32 = arith.constant 6 : i32
    %28 = vector.broadcast %c6_i32 : i32 to vector<1x8xi32>
    %29 = arith.cmpi eq, %27, %28 : vector<1x8xi32>
    %cst_17 = arith.constant 0.000000e+00 : f32
    %cst_18 = arith.constant -1.000000e+04 : f32
    %30 = vector.broadcast %cst_17 : f32 to vector<1x8xf32>
    %31 = vector.broadcast %cst_18 : f32 to vector<1x8xf32>
    %32 = arith.select %29, %30, %31 : vector<1x8xi1>, vector<1x8xf32>
    %c0_i32 = arith.constant 0 : i32
    %c16_i32 = arith.constant 16 : i32
    %33 = arith.addi %c0_i32, %c16_i32 : i32
    %c1_i32 = arith.constant 1 : i32
    %34 = scf.for %arg11 = %c0_i32 to %33 step %c1_i32 iter_args(%arg12 = %32) -> (vector<1x8xf32>)  : i32 {
      %57 = arith.index_cast %arg11 : i32 to index
      %c0_34 = arith.constant 0 : index
      %58 = vector.load %arg6[%57, %c0_34] : memref<16x8xf32, #tpu.memory_space<vmem>>, vector<1x8xf32>
      %59 = vector.broadcast %arg12 : vector<1x8xf32> to vector<8x8xf32>
      %60 = arith.addf %59, %25 : vector<8x8xf32>
      %cst_35 = arith.constant dense<0xFF800000> : vector<8xf32>
      %61 = vector.multi_reduction <maximumf>, %60, %cst_35 [1] : vector<8x8xf32> to vector<8xf32>
      %62 = vector.shape_cast %61 : vector<8xf32> to vector<8x1xf32>
      %63 = vector.broadcast %62 : vector<8x1xf32> to vector<8x8xf32>
      %64 = arith.cmpf oge, %60, %63 : vector<8x8xf32>
      %c8_i32_36 = arith.constant 8 : i32
      %65 = vector.broadcast %c8_i32_36 : i32 to vector<8x8xi32>
      %66 = arith.select %64, %26, %65 : vector<8x8xi1>, vector<8x8xi32>
      %cst_37 = arith.constant dense<2147483647> : vector<8xi32>
      %67 = vector.multi_reduction <minsi>, %66, %cst_37 [1] : vector<8x8xi32> to vector<8xi32>
      %68 = vector.shape_cast %67 : vector<8xi32> to vector<8x1xi32>
      %69 = tpu.transpose %68, [1, 0] : vector<8x1xi32> -> vector<1x8xi32>
      %70 = arith.index_cast %arg11 : i32 to index
      %c0_38 = arith.constant 0 : index
      %71 = vector.load %arg10[%70, %c0_38] : memref<16x8xi32, #tpu.memory_space<vmem>>, vector<1x8xi32>
      tpu.vector_store %arg10[%70, %c0_38], %69 {strides = array<i32>} : memref<16x8xi32, #tpu.memory_space<vmem>>, vector<1x8xi32>,
      %72 = tpu.transpose %62, [1, 0] : vector<8x1xf32> -> vector<1x8xf32>
      %73 = arith.addf %72, %58 : vector<1x8xf32>
      scf.yield %73 : vector<1x8xf32>
    }
    %c16_i32_19 = arith.constant 16 : i32
    %35 = vector.extract_strided_slice %25 {offsets = [7, 0], sizes = [1, 8], strides = [1, 1]} : vector<8x8xf32> to vector<1x8xf32>
    %36 = arith.addf %34, %35 : vector<1x8xf32>
    %cst_20 = arith.constant dense<0xFF800000> : vector<1xf32>
    %37 = vector.multi_reduction <maximumf>, %36, %cst_20 [1] : vector<1x8xf32> to vector<1xf32>
    %38 = vector.shape_cast %37 : vector<1xf32> to vector<1x1xf32>
    %39 = vector.broadcast %38 : vector<1x1xf32> to vector<1x8xf32>
    %40 = arith.cmpf oge, %36, %39 : vector<1x8xf32>
    %c8_i32 = arith.constant 8 : i32
    %41 = vector.broadcast %c8_i32 : i32 to vector<1x8xi32>
    %42 = arith.select %40, %27, %41 : vector<1x8xi1>, vector<1x8xi32>
    %cst_21 = arith.constant dense<2147483647> : vector<1xi32>
    %43 = vector.multi_reduction <minsi>, %42, %cst_21 [1] : vector<1x8xi32> to vector<1xi32>
    %44 = vector.shape_cast %43 : vector<1xi32> to vector<1x1xi32>
    %c0_22 = arith.constant 0 : index
    %c0_23 = arith.constant 0 : index
    %45 = vector.load %arg8[%c0_22, %c0_23] : memref<1x1xf32, #tpu.memory_space<vmem>>, vector<1x1xf32>
    tpu.vector_store %arg8[%c0_22, %c0_23], %38 {strides = array<i32>} : memref<1x1xf32, #tpu.memory_space<vmem>>, vector<1x1xf32>,
    %c15 = arith.constant 15 : index
    %c0_24 = arith.constant 0 : index
    %46 = vector.load %arg7[%c15, %c0_24] : memref<16x1xi32, #tpu.memory_space<vmem>>, vector<1x1xi32>
    tpu.vector_store %arg7[%c15, %c0_24], %44 {strides = array<i32>} : memref<16x1xi32, #tpu.memory_space<vmem>>, vector<1x1xi32>,
    %c0_i32_25 = arith.constant 0 : i32
    %c15_i32 = arith.constant 15 : i32
    %47 = arith.addi %c0_i32_25, %c15_i32 : i32
    %c1_i32_26 = arith.constant 1 : i32
    %48 = scf.for %arg11 = %c0_i32_25 to %47 step %c1_i32_26 iter_args(%arg12 = %44) -> (vector<1x1xi32>)  : i32 {
      %c14_i32 = arith.constant 14 : i32
      %57 = arith.subi %c14_i32, %arg11 : i32
      %c1_i32_34 = arith.constant 1 : i32
      %58 = arith.addi %57, %c1_i32_34 : i32
      %59 = arith.index_cast %58 : i32 to index
      %c0_35 = arith.constant 0 : index
      %60 = vector.load %arg10[%59, %c0_35] : memref<16x8xi32, #tpu.memory_space<vmem>>, vector<1x8xi32>
      %61 = vector.broadcast %arg12 : vector<1x1xi32> to vector<1x8xi32>
      %62 = arith.cmpi eq, %27, %61 : vector<1x8xi32>
      %c0_i32_36 = arith.constant 0 : i32
      %63 = vector.broadcast %c0_i32_36 : i32 to vector<1x8xi32>
      %64 = arith.select %62, %60, %63 : vector<1x8xi1>, vector<1x8xi32>
      %cst_37 = arith.constant dense<0> : vector<1xi32>
      %65 = vector.multi_reduction <add>, %64, %cst_37 [1] : vector<1x8xi32> to vector<1xi32>
      %66 = vector.shape_cast %65 : vector<1xi32> to vector<1x1xi32>
      %67 = arith.index_cast %57 : i32 to index
      %c0_38 = arith.constant 0 : index
      %68 = vector.load %arg7[%67, %c0_38] : memref<16x1xi32, #tpu.memory_space<vmem>>, vector<1x1xi32>
      tpu.vector_store %arg7[%67, %c0_38], %66 {strides = array<i32>} : memref<16x1xi32, #tpu.memory_space<vmem>>, vector<1x1xi32>,
      scf.yield %66 : vector<1x1xi32>
    }
    %c15_i32_27 = arith.constant 15 : i32
    %49 = vector.broadcast %48 : vector<1x1xi32> to vector<1x8xi32>
    %50 = arith.cmpi eq, %27, %49 : vector<1x8xi32>
    %c0_28 = arith.constant 0 : index
    %c0_29 = arith.constant 0 : index
    %51 = vector.load %arg10[%c0_28, %c0_29] : memref<16x8xi32, #tpu.memory_space<vmem>>, vector<1x8xi32>
    %c0_i32_30 = arith.constant 0 : i32
    %52 = vector.broadcast %c0_i32_30 : i32 to vector<1x8xi32>
    %53 = arith.select %50, %51, %52 : vector<1x8xi1>, vector<1x8xi32>
    %cst_31 = arith.constant dense<0> : vector<1xi32>
    %54 = vector.multi_reduction <add>, %53, %cst_31 [1] : vector<1x8xi32> to vector<1xi32>
    %55 = vector.shape_cast %54 : vector<1xi32> to vector<1x1xi32>
    %c0_32 = arith.constant 0 : index
    %c0_33 = arith.constant 0 : index
    %56 = vector.load %arg9[%c0_32, %c0_33] : memref<1x1xi32, #tpu.memory_space<vmem>>, vector<1x1xi32>
    tpu.vector_store %arg9[%c0_32, %c0_33], %55 {strides = array<i32>} : memref<1x1xi32, #tpu.memory_space<vmem>>, vector<1x1xi32>,
    return
  }
}

</mosaic_0001>

<llo_original>
// kernel: crf_nn_bert_forward.1
$region0: #{crf_nn_bert_forward.1}
  #allocation0 [shape = 'u32[]', space=smem, size = 0x4, offset = 0x4, fixed_abs, tag = 'smem constant byte address 0x4 - core index']
  #allocation1 [shape = 'u32[72,128]{1,0:T(1,128)}', space=vmem, size = 0x9000, scoped, tag = 'internal scratch']
  #allocation2 [shape = 's32[16,8]{1,0:T(8,128)}', space=vmem, size = 0x2000, scoped, tag = 'scratch operand']
  %s0 = inlined_call_operand.vmem [shape: f32[16,32], index: 0, kind: input, shape index: {}]
  %s1 = inlined_call_operand.vmem [shape: f32[32,32], index: 1, kind: input, shape index: {}]
  %s2 = inlined_call_operand.vmem [shape: f32[1,32], index: 2, kind: input, shape index: {}]
  %s3 = inlined_call_operand.vmem [shape: f32[32,8], index: 3, kind: input, shape index: {}]
  %s4 = inlined_call_operand.vmem [shape: f32[1,8], index: 4, kind: input, shape index: {}]
  %s5 = inlined_call_operand.vmem [shape: f32[8,8], index: 5, kind: input, shape index: {}]
  %s6 = inlined_call_operand.vmem [shape: f32[16,8], index: 6, kind: output, shape index: {0}]
  %s7 = inlined_call_operand.vmem [shape: s32[16,1], index: 7, kind: output, shape index: {1}]
  %s8 = inlined_call_operand.hbm [shape: f32[1,1], index: 8, kind: output, shape index: {2}]
  %s9 = inlined_call_operand.hbm [shape: s32[1,1], index: 9, kind: output, shape index: {3}]
  %10 = xla_tuple %s6, %s7, %s8, %s9
  %s11 = sld [smem:[#allocation0]]
  $region72: #{crf_nn_bert_forward.1} parent=0
    _
  %s13 = ssub.s32 1, %s11
  %s14 = scalar_select 0, %s13, %s11
  $region1: #{crf_nn_bert_forward.1} parent=0
    #allocation3 [shape = 'u8[512]{0}', space=vmem, size = 0x400, scoped, tag = 'output window, operand 2, single buffered']
    #allocation4 [shape = 's32[1]{0}', space=sflag, size = 0x4, scoped, tag = 'scoped memory for crf_nn_bert_forward.1']
    #allocation5 [shape = 'u8[512]{0}', space=vmem, size = 0x400, scoped, tag = 'output window, operand 3, single buffered']
    #allocation6 [shape = 's32[1]{0}', space=sflag, size = 0x4, scoped, tag = 'scoped memory for crf_nn_bert_forward.1']
    %15 = vsyncpa [#allocation4], 0
    %16 = vsyncpa [#allocation6], 0
    // Predicated region
    $region2: #{crf_nn_bert_forward.1} parent=1 // pred_check
      _
    $region3: #{crf_nn_bert_forward.1} parent=1 // pred_check_branch
      %18 = sbr.rel (0) target = $region5
    $region4: #{crf_nn_bert_forward.1} parent=1 // pred_region
      _
    $region5: #{crf_nn_bert_forward.1} parent=1 // pred_fallthru
      _
    // Predicated region
    $region6: #{crf_nn_bert_forward.1} parent=1 // pred_check
      _
    $region7: #{crf_nn_bert_forward.1} parent=1 // pred_check_branch
      %20 = sbr.rel (0) target = $region9
    $region8: #{crf_nn_bert_forward.1} parent=1 // pred_region
      _
    $region9: #{crf_nn_bert_forward.1} parent=1 // pred_fallthru
      _
    // Predicated region
    $region10: #{crf_nn_bert_forward.1} parent=1 // pred_check
      _
    $region11: #{crf_nn_bert_forward.1} parent=1 // pred_check_branch
      %22 = sbr.rel (0) target = $region13
    $region12: #{crf_nn_bert_forward.1} parent=1 // pred_region
      _
    $region13: #{crf_nn_bert_forward.1} parent=1 // pred_fallthru
      _
    // Predicated region
    $region14: #{crf_nn_bert_forward.1} parent=1 // pred_check
      _
    $region15: #{crf_nn_bert_forward.1} parent=1 // pred_check_branch
      %24 = sbr.rel (0) target = $region17
    $region16: #{crf_nn_bert_forward.1} parent=1 // pred_region
      _
    $region17: #{crf_nn_bert_forward.1} parent=1 // pred_fallthru
      _
    // Predicated region
    $region18: #{crf_nn_bert_forward.1} parent=1 // pred_check
      _
    $region19: #{crf_nn_bert_forward.1} parent=1 // pred_check_branch
      %26 = sbr.rel (0) target = $region21
    $region20: #{crf_nn_bert_forward.1} parent=1 // pred_region
      _
    $region21: #{crf_nn_bert_forward.1} parent=1 // pred_fallthru
      _
    // Predicated region
    $region22: #{crf_nn_bert_forward.1} parent=1 // pred_check
      _
    $region23: #{crf_nn_bert_forward.1} parent=1 // pred_check_branch
      %28 = sbr.rel (0) target = $region25
    $region24: #{crf_nn_bert_forward.1} parent=1 // pred_region
      _
    $region25: #{crf_nn_bert_forward.1} parent=1 // pred_fallthru
      _
    %v29 = vld [vmem:[%s0] sm:$0xff]
    %v30 = vld [vmem:[%s0 + $0x8] sm:$0xff]
    %v31 = vld [vmem:[%s1] sm:$0xff]
    %v32 = vld [vmem:[%s1 + $0x8] sm:$0xff]
    %v33 = vld [vmem:[%s1 + $0x10] sm:$0xff]
    %v34 = vld [vmem:[%s1 + $0x18] sm:$0xff]
    %v35 = vld [vmem:[%s2] sm:$0x1]
    %v37 = vperm.slane %v35, 0
    %vm39 = vcmask 261120
    %v41 = vsel %vm39, %v29, 0
    %v44 = vsel %vm39, %v30, 0
    %46 = vmatpush.msra.mxu0 0.0
    %47 = vmatpush.msra.mxu0 0.0
    %48 = vmatpush.msra.mxu0 0.0
    %49 = vmatpush.msra.mxu0 0.0
    %50 = vmatpush.msra.mxu0 0.0
    %51 = vmatpush.msra.mxu0 0.0
    %52 = vmatpush.msra.mxu0 0.0
    %53 = vmatpush.msra.mxu0 0.0
    %54 = vmatpush.msra.mxu0 0.0
    %55 = vmatpush.msra.mxu0 0.0
    %56 = vmatpush.msra.mxu0 0.0
    %57 = vmatpush.msra.mxu0 0.0
    %58 = vmatpush.msra.mxu0 %v34
    %59 = vmatpush.msra.mxu0 %v33
    %60 = vmatpush.msra.mxu0 %v32
    %61 = vmatpush.msra.mxu0 %v31
    %62 = vmatmul.f32.gmra.mxu0 %v41
    %v63 = vpop.f32.mrf.mxu0
    %v64 = vadd.f32 %v37, %v63
    %65 = vmatmul.f32.gmra.mxu0 %v44
    %v66 = vpop.f32.mrf.mxu0
    %v67 = vadd.f32 %v37, %v66
    %68 = vdwg.mxu0
    %v69 = vmax.f32 %v64, 0.0
    %v70 = vmax.f32 %v67, 0.0
    %v71 = vld [vmem:[%s3] sm:$0xff]
    %v72 = vld [vmem:[%s3 + $0x8] sm:$0xff]
    %v73 = vld [vmem:[%s3 + $0x10] sm:$0xff]
    %v74 = vld [vmem:[%s3 + $0x18] sm:$0xff]
    %v75 = vld [vmem:[%s4] sm:$0x1]
    %v77 = vperm.slane %v75, 0
    %v80 = vsel %vm39, %v69, 0
    %v83 = vsel %vm39, %v70, 0
    %85 = vmatpush.msra.mxu0 0.0
    %86 = vmatpush.msra.mxu0 0.0
    %87 = vmatpush.msra.mxu0 0.0
    %88 = vmatpush.msra.mxu0 0.0
    %89 = vmatpush.msra.mxu0 0.0
    %90 = vmatpush.msra.mxu0 0.0
    %91 = vmatpush.msra.mxu0 0.0
    %92 = vmatpush.msra.mxu0 0.0
    %93 = vmatpush.msra.mxu0 0.0
    %94 = vmatpush.msra.mxu0 0.0
    %95 = vmatpush.msra.mxu0 0.0
    %96 = vmatpush.msra.mxu0 0.0
    %97 = vmatpush.msra.mxu0 %v74
    %98 = vmatpush.msra.mxu0 %v73
    %99 = vmatpush.msra.mxu0 %v72
    %100 = vmatpush.msra.mxu0 %v71
    %101 = vmatmul.f32.gmra.mxu0 %v80
    %v102 = vpop.f32.mrf.mxu0
    %v103 = vadd.f32 %v77, %v102
    %104 = vmatmul.f32.gmra.mxu0 %v83
    %v105 = vpop.f32.mrf.mxu0
    %v106 = vadd.f32 %v77, %v105
    %107 = vdwg.mxu0
    %vm108 = vcmask 64512
    %v109 = vsel %vm108, %v103, -inf
    %110 = vmax.xlane.f32.xlu0 %v109
    %v111 = vpop.xlane.xlu0 %110
    %v112 = vsel %vm108, %v106, -inf
    %113 = vmax.xlane.f32.xlu0 %v112
    %v114 = vpop.xlane.xlu0 %113
    %v115 = vsub.f32 %v103, %v111
    %v116 = vsub.f32 %v106, %v114
    %v117 = vmul.f32 %v115, 1.442695
    %v118 = vpow.pop %v117
    %v119 = vmul.f32 %v116, 1.442695
    %v120 = vpow.pop %v119
    %v121 = vsel %vm108, %v118, 0.0
    %122 = vadd.xlane.f32.xlu0 %v121
    %v123 = vpop.xlane.xlu0 %122
    %v124 = vsel %vm108, %v120, 0.0
    %125 = vadd.xlane.f32.xlu0 %v124
    %v126 = vpop.xlane.xlu0 %125
    %v127 = vlog2.pop %v123
    %v128 = vmul.f32 %v127, 0.6931472
    %v129 = vlog2.pop %v126
    %v130 = vmul.f32 %v129, 0.6931472
    %v131 = vadd.f32 %v111, %v128
    %v132 = vadd.f32 %v114, %v130
    %v133 = vsub.f32 %v103, %v131
    %v134 = vsub.f32 %v106, %v132
    %135 = vst.msk [vmem:[%s6] sm:$0xff] %vm108, %v133
    %136 = vst.msk [vmem:[%s6 + $0x8] sm:$0xff] %vm108, %v134
    %v137 = vld [vmem:[%s5] sm:$0xff]
    %v138 = vlaneseq
    %v139 = vand.u32 %v138, 127
    %vm140 = vcmp.eq.s32.totalorder %v139, 6
    %v141 = vsel %vm140, 0.0, -10000.0
    loop: start=0, step=1, limit=16
    $region26: #{crf_nn_bert_forward.1} parent=1 // loop_pre_header
      _
    $region27: #{crf_nn_bert_forward.1} parent=1 // loop_header
      %s143 = sphi 0, %s147
      %p144 = scmp.ge.s32.totalorder %s143, 16
      %v148 = vphi %v141, %v240
    $region28: #{crf_nn_bert_forward.1} parent=1 // loop_header_branch
      %146 = sbr.rel (%p144) target = $region32
    $region29: #{crf_nn_bert_forward.1} parent=1 // loop_body
      %s149 = scalar_lea.vmem %s6, %s143
      %v150 = vld [vmem:[%s149] sm:$0x1]
      %v151 = vperm.slane %v148, 0
      %v152 = vadd.f32 %v151, %v137
      %v153 = vsel %vm108, %v152, -inf
      %154 = vmax.xlane.f32.xlu0 %v153
      %v155 = vpop.xlane.xlu0 %154
      %vm156 = vcmp.ge.f32.partialorder %v152, %v155
      %v157 = vsel %vm156, %v139, 8
      %v158 = vsel %vm108, %v157, 2147483647
      %v159 = vand.u32 %v158, 65535
      %v160 = vshra.s32 %v158, 16
      %v161 = vcvt.s32.f32 %v159
      %v162 = vcvt.s32.f32 %v160
      %163 = vmin.xlane.f32.xlu0 %v162
      %v164 = vpop.xlane.xlu0 %163
      %vm165 = vcmp.eq.f32.partialorder %v162, %v164
      %v166 = vsel %vm165, %v161, inf
      %167 = vmin.xlane.f32.xlu0 %v166
      %v168 = vpop.xlane.xlu0 %167
      %v169 = vcvt.f32.s32 %v168
      %v170 = vcvt.f32.s32 %v164
      %v171 = vshll.u32 %v170, 16
      %v172 = vadd.s32 %v171, %v169
      %173 = vxpose.xlu0.b32.start [1/16] %v172, 128
      %174 = vxpose.xlu0.b32.cont [2/16] 0, 128
      %175 = vxpose.xlu0.b32.cont [3/16] 0, 128
      %176 = vxpose.xlu0.b32.cont [4/16] 0, 128
      %177 = vxpose.xlu0.b32.cont [5/16] 0, 128
      %178 = vxpose.xlu0.b32.cont [6/16] 0, 128
      %179 = vxpose.xlu0.b32.cont [7/16] 0, 128
      %180 = vxpose.xlu0.b32.cont [8/16] 0, 128
      %181 = vxpose.xlu0.b32.cont [9/16] 0, 128
      %182 = vxpose.xlu0.b32.cont [10/16] 0, 128
      %183 = vxpose.xlu0.b32.cont [11/16] 0, 128
      %184 = vxpose.xlu0.b32.cont [12/16] 0, 128
      %185 = vxpose.xlu0.b32.cont [13/16] 0, 128
      %186 = vxpose.xlu0.b32.cont [14/16] 0, 128
      %187 = vxpose.xlu0.b32.cont [15/16] 0, 128
      %188 = vxpose.xlu0.b32.end [16/16] 0, 128
      %v189 = vpop.trf.xlu0
      %v190 = vpop.trf.xlu0
      %v191 = vpop.trf.xlu0
      %v192 = vpop.trf.xlu0
      %v193 = vpop.trf.xlu0
      %v194 = vpop.trf.xlu0
      %v195 = vpop.trf.xlu0
      %v196 = vpop.trf.xlu0
      %v197 = vpop.trf.xlu0
      %v198 = vpop.trf.xlu0
      %v199 = vpop.trf.xlu0
      %v200 = vpop.trf.xlu0
      %v201 = vpop.trf.xlu0
      %v202 = vpop.trf.xlu0
      %v203 = vpop.trf.xlu0
      %v204 = vpop.trf.xlu0
      %s205 = scalar_lea.vmem [#allocation2], %s143
      %vm206 = vcmask 57344
      %207 = vst.msk [vmem:[%s205] sm:$0x1] %vm206, %v189
      %208 = vxpose.xlu0.b32.start [1/16] %v155, 128
      %209 = vxpose.xlu0.b32.cont [2/16] 0.0, 128
      %210 = vxpose.xlu0.b32.cont [3/16] 0.0, 128
      %211 = vxpose.xlu0.b32.cont [4/16] 0.0, 128
      %212 = vxpose.xlu0.b32.cont [5/16] 0.0, 128
      %213 = vxpose.xlu0.b32.cont [6/16] 0.0, 128
      %214 = vxpose.xlu0.b32.cont [7/16] 0.0, 128
      %215 = vxpose.xlu0.b32.cont [8/16] 0.0, 128
      %216 = vxpose.xlu0.b32.cont [9/16] 0.0, 128
      %217 = vxpose.xlu0.b32.cont [10/16] 0.0, 128
      %218 = vxpose.xlu0.b32.cont [11/16] 0.0, 128
      %219 = vxpose.xlu0.b32.cont [12/16] 0.0, 128
      %220 = vxpose.xlu0.b32.cont [13/16] 0.0, 128
      %221 = vxpose.xlu0.b32.cont [14/16] 0.0, 128
      %222 = vxpose.xlu0.b32.cont [15/16] 0.0, 128
      %223 = vxpose.xlu0.b32.end [16/16] 0.0, 128
      %v224 = vpop.trf.xlu0
      %v225 = vpop.trf.xlu0
      %v226 = vpop.trf.xlu0
      %v227 = vpop.trf.xlu0
      %v228 = vpop.trf.xlu0
      %v229 = vpop.trf.xlu0
      %v230 = vpop.trf.xlu0
      %v231 = vpop.trf.xlu0
      %v232 = vpop.trf.xlu0
      %v233 = vpop.trf.xlu0
      %v234 = vpop.trf.xlu0
      %v235 = vpop.trf.xlu0
      %v236 = vpop.trf.xlu0
      %v237 = vpop.trf.xlu0
      %v238 = vpop.trf.xlu0
      %v239 = vpop.trf.xlu0
      %v240 = vadd.f32 %v224, %v150
    $region30: #{crf_nn_bert_forward.1} parent=1 // loop_footer
      %s147 = sadd.s32 1, %s143
    $region31: #{crf_nn_bert_forward.1} parent=1 // loop_footer_branch
      %142 = sbr.rel target = $region27
    $region32: #{crf_nn_bert_forward.1} parent=1 // loop_exit
      _
    %v242 = vrot.slane %v137, 7
    %v244 = vadd.f32 %v148, %v242
    %vm245 = vcmask 57344
    %v246 = vsel %vm245, %v244, -inf
    %247 = vmax.xlane.f32.xlu0 %v246
    %v248 = vpop.xlane.xlu0 %247
    %vm249 = vcmp.ge.f32.partialorder %v244, %v248
    %v250 = vsel %vm249, %v139, 8
    %v251 = vsel %vm245, %v250, 2147483647
    %v252 = vand.u32 %v251, 65535
    %v253 = vshra.s32 %v251, 16
    %v254 = vcvt.s32.f32 %v252
    %v255 = vcvt.s32.f32 %v253
    %256 = vmin.xlane.f32.xlu0 %v255
    %v257 = vpop.xlane.xlu0 %256
    %vm258 = vcmp.eq.f32.partialorder %v255, %v257
    %v259 = vsel %vm258, %v254, inf
    %260 = vmin.xlane.f32.xlu0 %v259
    %v261 = vpop.xlane.xlu0 %260
    %v262 = vcvt.f32.s32 %v261
    %v263 = vcvt.f32.s32 %v257
    %v264 = vshll.u32 %v263, 16
    %v265 = vadd.s32 %v264, %v262
    %vm266 = vcmask 0
    %267 = vst.msk [vmem:[#allocation3] sm:$0x1] %vm266, %v248
    %268 = vst.msk [vmem:[%s7 + $0xf] sm:$0x1] %vm266, %v265
    loop: start=0, step=1, limit=15
    $region33: #{crf_nn_bert_forward.1} parent=1 // loop_pre_header
      _
    $region34: #{crf_nn_bert_forward.1} parent=1 // loop_header
      %s270 = sphi 0, %s274
      %p271 = scmp.ge.s32.totalorder %s270, 15
      %v275 = vphi %v265, %v294
    $region35: #{crf_nn_bert_forward.1} parent=1 // loop_header_branch
      %273 = sbr.rel (%p271) target = $region39
    $region36: #{crf_nn_bert_forward.1} parent=1 // loop_body
      %s276 = ssub.s32 14, %s270
      %s277 = ssub.s32 15, %s270
      %s278 = scalar_lea.vmem [#allocation2], %s277
      %v279 = vld [vmem:[%s278] sm:$0x1]
      %vm280 = vcmp.eq.s32.totalorder %v139, %v275
      %v281 = vsel %vm280, %v279, 0
      %v282 = vsel %vm245, %v281, 0
      %v283 = vand.u32 %v282, 65535
      %v284 = vshrl.u32 %v282, 16
      %v285 = vcvt.s32.f32 %v283
      %v286 = vcvt.s32.f32 %v284
      %287 = vadd.xlane.f32.xlu0 %v285
      %v288 = vpop.xlane.xlu0 %287
      %289 = vadd.xlane.f32.xlu0 %v286
      %v290 = vpop.xlane.xlu0 %289
      %v291 = vcvt.f32.s32 %v288
      %v292 = vcvt.f32.s32 %v290
      %v293 = vshll.u32 %v292, 16
      %v294 = vadd.s32 %v293, %v291
      %s295 = scalar_lea.vmem %s7, %s276
      %296 = vst.msk [vmem:[%s295] sm:$0x1] %vm266, %v294
    $region37: #{crf_nn_bert_forward.1} parent=1 // loop_footer
      %s274 = sadd.s32 1, %s270
    $region38: #{crf_nn_bert_forward.1} parent=1 // loop_footer_branch
      %269 = sbr.rel target = $region34
    $region39: #{crf_nn_bert_forward.1} parent=1 // loop_exit
      _
    %vm297 = vcmp.eq.s32.totalorder %v139, %v275
    %v298 = vld [vmem:[#allocation2] sm:$0x1]
    %v299 = vsel %vm297, %v298, 0
    %v300 = vsel %vm245, %v299, 0
    %v301 = vand.u32 %v300, 65535
    %v302 = vshrl.u32 %v300, 16
    %v303 = vcvt.s32.f32 %v301
    %v304 = vcvt.s32.f32 %v302
    %305 = vadd.xlane.f32.xlu0 %v303
    %v306 = vpop.xlane.xlu0 %305
    %307 = vadd.xlane.f32.xlu0 %v304
    %v308 = vpop.xlane.xlu0 %307
    %v309 = vcvt.f32.s32 %v306
    %v310 = vcvt.f32.s32 %v308
    %v311 = vshll.u32 %v310, 16
    %v312 = vadd.s32 %v311, %v309
    %313 = vst.msk [vmem:[#allocation5] sm:$0x1] %vm266, %v312
    // Predicated region
    $region40: #{crf_nn_bert_forward.1} parent=1 // pred_check
      _
    $region41: #{crf_nn_bert_forward.1} parent=1 // pred_check_branch
      %315 = sbr.rel (0) target = $region43
    $region42: #{crf_nn_bert_forward.1} parent=1 // pred_region
      _
    $region43: #{crf_nn_bert_forward.1} parent=1 // pred_fallthru
      _
    // Predicated region
    $region44: #{crf_nn_bert_forward.1} parent=1 // pred_check
      _
    $region45: #{crf_nn_bert_forward.1} parent=1 // pred_check_branch
      %317 = sbr.rel (0) target = $region47
    $region46: #{crf_nn_bert_forward.1} parent=1 // pred_region
      _
    $region47: #{crf_nn_bert_forward.1} parent=1 // pred_fallthru
      _
    // Predicated region
    $region48: #{crf_nn_bert_forward.1} parent=1 // pred_check
      _
    $region49: #{crf_nn_bert_forward.1} parent=1 // pred_check_branch
      %319 = sbr.rel (0) target = $region51
    $region50: #{crf_nn_bert_forward.1} parent=1 // pred_region
      %321 = vsyncadd [#allocation4], 0
      %s323 = sshll.u32 [#allocation3], 4
      %s324 = int_to_ptr.vmem [resolvable:$true] %s323
      %s325 = sshll.u32 %s8, 4
      %s326 = int_to_ptr.hbm [resolvable:$true] %s325
      %328 = dma.vmem_to_hbm [thread:$0]  %s324, 16, %s326, [#allocation4]
    $region51: #{crf_nn_bert_forward.1} parent=1 // pred_fallthru
      _
    // Predicated region
    $region52: #{crf_nn_bert_forward.1} parent=1 // pred_check
      _
    $region53: #{crf_nn_bert_forward.1} parent=1 // pred_check_branch
      %330 = sbr.rel (0) target = $region55
    $region54: #{crf_nn_bert_forward.1} parent=1 // pred_region
      %332 = vsyncadd [#allocation6], 0
      %s334 = sshll.u32 [#allocation5], 4
      %s335 = int_to_ptr.vmem [resolvable:$true] %s334
      %s336 = sshll.u32 %s9, 4
      %s337 = int_to_ptr.hbm [resolvable:$true] %s336
      %339 = dma.vmem_to_hbm [thread:$0]  %s335, 16, %s337, [#allocation6]
    $region55: #{crf_nn_bert_forward.1} parent=1 // pred_fallthru
      _
    // Predicated region
    $region56: #{crf_nn_bert_forward.1} parent=1 // pred_check
      _
    $region57: #{crf_nn_bert_forward.1} parent=1 // pred_check_branch
      %341 = sbr.rel (0) target = $region59
    $region58: #{crf_nn_bert_forward.1} parent=1 // pred_region
      _
    $region59: #{crf_nn_bert_forward.1} parent=1 // pred_fallthru
      _
    // Predicated region
    $region60: #{crf_nn_bert_forward.1} parent=1 // pred_check
      _
    $region61: #{crf_nn_bert_forward.1} parent=1 // pred_check_branch
      %343 = sbr.rel (0) target = $region63
    $region62: #{crf_nn_bert_forward.1} parent=1 // pred_region
      _
    $region63: #{crf_nn_bert_forward.1} parent=1 // pred_fallthru
      _
    // Predicated region
    $region64: #{crf_nn_bert_forward.1} parent=1 // pred_check
      _
    $region65: #{crf_nn_bert_forward.1} parent=1 // pred_check_branch
      %345 = sbr.rel (0) target = $region67
    $region66: #{crf_nn_bert_forward.1} parent=1 // pred_region
      %347 = dma.done [#allocation4], 16
    $region67: #{crf_nn_bert_forward.1} parent=1 // pred_fallthru
      _
    // Predicated region
    $region68: #{crf_nn_bert_forward.1} parent=1 // pred_check
      _
    $region69: #{crf_nn_bert_forward.1} parent=1 // pred_check_branch
      %349 = sbr.rel (0) target = $region71
    $region70: #{crf_nn_bert_forward.1} parent=1 // pred_region
      %351 = dma.done [#allocation6], 16
    $region71: #{crf_nn_bert_forward.1} parent=1 // pred_fallthru
      _
    %352 = vsyncpa [#allocation4], 1
    %353 = vsyncpa [#allocation6], 1

</llo_original>
